<compile_context>
chip_gen: v7x
topology: tpu7x:2x2x1
jax: 0.10.0
libtpu: 0.0.40
codegen_flags: <defaults>
</compile_context>

<pallas_src>
import math
import jax
import jax.numpy as jnp
from jax.experimental import pallas as pl
from jax.experimental.pallas import tpu as pltpu  # noqa: F401  (kept for TPU-specific tuning hooks)


# ----------------------------------------------------------------------------
# Pallas kernel: fused interaction network (single launch, no grid).
#   relation MLP -> effects, masked receiver aggregation (block-diag matmul),
#   object MLP.  All matmuls accumulate in f32.
# ----------------------------------------------------------------------------
def _interaction_kernel(rel_ref, obj_ref, agg_ref,
                        wr1_ref, br1_ref, wr2_ref, br2_ref,
                        wo1o_ref, wo1a_ref, bo1_ref, wo2_ref, bo2_ref,
                        out_ref):
    rel = rel_ref[...]                                                    # (B*n_rel, R_in)
    h1 = jnp.maximum(
        jnp.dot(rel, wr1_ref[...], preferred_element_type=jnp.float32) + br1_ref[...],
        0.0)                                                              # (B*n_rel, H1)
    eff = jnp.maximum(
        jnp.dot(h1, wr2_ref[...], preferred_element_type=jnp.float32) + br2_ref[...],
        0.0)                                                              # (B*n_rel, E)
    # masked receiver aggregation: block-diagonal (B*n_obj, B*n_rel) matrix
    agg = jnp.dot(agg_ref[...], eff, preferred_element_type=jnp.float32)  # (B*n_obj, E)
    pre = (jnp.dot(obj_ref[...], wo1o_ref[...], preferred_element_type=jnp.float32)
           + jnp.dot(agg, wo1a_ref[...], preferred_element_type=jnp.float32)
           + bo1_ref[...])
    h2 = jnp.maximum(pre, 0.0)
    out = jnp.dot(h2, wo2_ref[...], preferred_element_type=jnp.float32) + bo2_ref[...]
    out_ref[...] = out.astype(out_ref.dtype)


def interaction_net(rel_data, obj_data, agg_mat, params):
    """Fused `Net(rel_data, obj_data, ...)` in a single pallas_call."""
    B, n_rel, R_in = rel_data.shape
    _, n_obj, O_in = obj_data.shape
    wr1, br1, wr2, br2, wo1o, wo1a, bo1, wo2, bo2 = params
    OUT = wo2.shape[1]

    out_flat = pl.pallas_call(
        _interaction_kernel,
        out_shape=jax.ShapeDtypeStruct((B * n_obj, OUT), jnp.float32),
    )(rel_data.reshape(B * n_rel, R_in),
      obj_data.reshape(B * n_obj, O_in),
      agg_mat,
      wr1, br1, wr2, br2, wo1o, wo1a, bo1, wo2, bo2)
    return {"out_vel": out_flat.reshape(B, n_obj, OUT)}


# ----------------------------------------------------------------------------
# Deterministic scaler (constructor argument of the torch module)
# ----------------------------------------------------------------------------
class Scaler:
    def __init__(self, state_dim, shape_dim):
        base = jnp.array([2.0, 2.0, 1.0, 1.5, 1.5, 1.0, 1.0, 1.0], jnp.float32)
        self.state_scale = base[:state_dim]
        self.shape_scale = jnp.full((shape_dim,), 0.5, jnp.float32)
        self.vel_scale = jnp.array([1.5, 1.5, 1.0], jnp.float32)

    def transform(self, state, shape):
        return state / self.state_scale, shape / self.shape_scale

    def inv_transform_vel(self, v):
        return v * self.vel_scale


# ----------------------------------------------------------------------------
# The module itself
# ----------------------------------------------------------------------------
class GraphProcessorPhysicPredictor:
    def __init__(self, scaler, net_params):
        self.scaler = scaler
        self.net_params = net_params

    # ----- pre_proces --------------------------------------------------------
    def pre_process(self, x):
        objects_state = x["objects_state"]
        objects_shape = x["objects_shape"]
        relation_info = x["relation_info"]
        B, n_obj, _ = objects_state.shape
        n_rel = n_obj * (n_obj - 1)

        pos = objects_state[:, :, 0:2]
        diff = pos[:, :, None, :] - pos[:, None, :, :]
        dist = jnp.sqrt(jnp.sum(diff * diff, axis=-1))              # cdist, p=2
        # torch: where(d < 0.35, d, 0).nonzero()  ==  mask of (0 < d < 0.35)
        mask = jnp.logical_and(dist < 0.35, dist != 0.0)

        # static dense pair table, r = i*(n-1) + j - (j > i)
        i_idx, j_idx = [], []
        for i in range(n_obj):
            for j in range(n_obj):
                if i != j:
                    i_idx.append(i)
                    j_idx.append(j)
        i_arr = jnp.array(i_idx, jnp.int32)                          # receivers
        j_arr = jnp.array(j_idx, jnp.int32)                          # senders
        edge_mask = mask[:, i_arr, j_arr].astype(jnp.float32)        # (B, n_rel)

        data_state, data_shape = self.scaler.transform(objects_state, objects_shape)

        # gathers + mask instead of one-hot (K=n_obj) matmuls -- no MXU, no launch
        m = edge_mask[:, :, None]
        senders_state = m * jnp.take(data_state, j_arr, axis=1)
        receivers_state = m * jnp.take(data_state, i_arr, axis=1)
        senders_shape = m * jnp.take(data_shape, j_arr, axis=1)
        receivers_shape = m * jnp.take(data_shape, i_arr, axis=1)

        receivers_angles = receivers_state[:, :, 2:3]
        rb1 = jnp.concatenate([jnp.cos(receivers_angles), jnp.sin(receivers_angles)], -1)
        rb2 = jnp.concatenate([jnp.cos(receivers_angles + math.pi / 2),
                               jnp.sin(receivers_angles + math.pi / 2)], -1)
        diff_state = senders_state - receivers_state
        diff_pos = diff_state[:, :, 0:2]
        diff_vel = diff_state[:, :, 3:5]
        control = senders_state[:, :, 6:8]
        angle_diff = diff_state[:, :, 2:3]
        angle_diff_vel = diff_state[:, :, 5:6]
        basis = jnp.stack([rb1, rb2], axis=-2)                       # (B, n_rel, 2, 2)
        temp = jnp.stack([diff_pos, diff_vel, control], axis=-1)     # (B, n_rel, 2, 3)
        state_tfed = jnp.matmul(basis, temp)                         # tiny 2x2 rotations (glue)
        diff_pos = state_tfed[:, :, :, 0]
        diff_vel = state_tfed[:, :, :, 1]
        control = state_tfed[:, :, :, 2]
        diff_angle_2d = jnp.concatenate([jnp.sin(2 * angle_diff),
                                         jnp.cos(2 * angle_diff)], -1)
        diff_state = jnp.concatenate(
            [diff_pos, diff_vel, control, diff_angle_2d, angle_diff_vel], -1)
        rel_data = jnp.concatenate(
            [relation_info, diff_state, receivers_shape, senders_shape], -1)

        object_angles = data_state[:, :, 2:3]
        ob1 = jnp.concatenate([jnp.cos(object_angles), jnp.sin(object_angles)], -1)
        ob2 = jnp.concatenate([jnp.cos(object_angles + math.pi / 2),
                               jnp.sin(object_angles + math.pi / 2)], -1)
        object_basis = jnp.stack([ob1, ob2], axis=-2)
        obj_vel = data_state[:, :, 3:5][..., None]
        obj_vel_tfed = jnp.matmul(object_basis, obj_vel)[:, :, :, 0]
        obj_data = jnp.concatenate([obj_vel_tfed, data_state[:, :, 5:6], data_shape], -1)

        # block-diagonal masked receiver-aggregation matrix: (B*n_obj, B*n_rel)
        # agg_mat[b*n_obj+i, b*n_rel+r] = edge_mask[b, r] * [receiver(r) == i]
        recv_oh = jax.nn.one_hot(i_arr, n_obj, dtype=jnp.float32)            # (n_rel, n_obj)
        rrT = jnp.swapaxes(edge_mask[:, :, None] * recv_oh[None], 1, 2)      # (B, n_obj, n_rel)
        eyeB = jnp.eye(B, dtype=jnp.float32)
        agg_mat = (eyeB[:, None, :, None] * rrT[:, :, None, :]).reshape(B * n_obj, B * n_rel)
        return rel_data, obj_data, agg_mat

    # ----- post_proces -------------------------------------------------------
    def post_process(self, objects_state, network_outs):
        angles = objects_state[:, 1:, 2:3]
        pred = self.scaler.inv_transform_vel(network_outs["out_vel"][:, 1:, :])
        pred_vel = pred[:, :, :2]
        pred_angle_dot = pred[:, :, 2:]
        b1 = jnp.concatenate([jnp.cos(-angles), jnp.sin(-angles)], -1)
        b2 = jnp.concatenate([jnp.cos(-angles + math.pi / 2),
                              jnp.sin(-angles + math.pi / 2)], -1)
        basis = jnp.stack([b1, b2], axis=-2)
        vel_back = jnp.matmul(basis, pred_vel[..., None])[:, :, :, 0]
        x_dot = jnp.concatenate([vel_back, pred_angle_dot], -1)      # (B, n-1, 3)

        # closed form of  x6 @ trans_matrix_pre + x_dot @ trans_matrix_post :
        #   = [x6[:, :, :3] + x_dot, x_dot]
        x_next = jnp.concatenate([objects_state[:, 1:, :3] + x_dot, x_dot], axis=-1)
        return x_next

    # ----- forward -----------------------------------------------------------
    def __call__(self, x):
        rel_data, obj_data, agg_mat = self.pre_process(x)
        outs = interaction_net(rel_data, obj_data, agg_mat, self.net_params)
        self.outs = outs
        return self.post_process(x["objects_state"], outs)


# ----------------------------------------------------------------------------
# Pure-JAX reference of the original (matmul-based) torch formulation.
# ----------------------------------------------------------------------------
def reference_forward(x, scaler, params):
    objects_state = x["objects_state"]
    objects_shape = x["objects_shape"]
    relation_info = x["relation_info"]
    B, n_obj, _ = objects_state.shape
    pos = objects_state[:, :, :2]
    dist = jnp.sqrt(jnp.sum((pos[:, :, None, :] - pos[:, None, :, :]) ** 2, -1))
    mask = jnp.logical_and(dist < 0.35, dist != 0.0)
    pairs = [(i, j) for i in range(n_obj) for j in range(n_obj) if i != j]
    i_arr = jnp.array([p[0] for p in pairs], jnp.int32)
    j_arr = jnp.array([p[1] for p in pairs], jnp.int32)
    em = mask[:, i_arr, j_arr].astype(jnp.float32)[:, :, None]
    recv = em * jax.nn.one_hot(i_arr, n_obj, dtype=jnp.float32)[None]
    send = em * jax.nn.one_hot(j_arr, n_obj, dtype=jnp.float32)[None]
    ds, dsh = scaler.transform(objects_state, objects_shape)
    ss, rs = send @ ds, recv @ ds
    ssh, rsh = send @ dsh, recv @ dsh
    ra = rs[:, :, 2:3]
    basis = jnp.stack([jnp.concatenate([jnp.cos(ra), jnp.sin(ra)], -1),
                       jnp.concatenate([jnp.cos(ra + math.pi / 2),
                                        jnp.sin(ra + math.pi / 2)], -1)], -2)
    d = ss - rs
    tmp = jnp.stack([d[:, :, 0:2], d[:, :, 3:5], ss[:, :, 6:8]], -1)
    tf = basis @ tmp
    da2 = jnp.concatenate([jnp.sin(2 * d[:, :, 2:3]), jnp.cos(2 * d[:, :, 2:3])], -1)
    dstate = jnp.concatenate([tf[..., 0], tf[..., 1], tf[..., 2], da2, d[:, :, 5:6]], -1)
    rel = jnp.concatenate([relation_info, dstate, rsh, ssh], -1)
    oa = ds[:, :, 2:3]
    ob = jnp.stack([jnp.concatenate([jnp.cos(oa), jnp.sin(oa)], -1),
                    jnp.concatenate([jnp.cos(oa + math.pi / 2),
                                     jnp.sin(oa + math.pi / 2)], -1)], -2)
    ov = (ob @ ds[:, :, 3:5][..., None])[..., 0]
    obj = jnp.concatenate([ov, ds[:, :, 5:6], dsh], -1)
    wr1, br1, wr2, br2, wo1o, wo1a, bo1, wo2, bo2 = params
    h1 = jax.nn.relu(rel @ wr1 + br1)
    eff = jax.nn.relu(h1 @ wr2 + br2)
    agg = jnp.swapaxes(recv, 1, 2) @ eff
    h2 = jax.nn.relu(obj @ wo1o + agg @ wo1a + bo1)
    out = h2 @ wo2 + bo2
    ang = objects_state[:, 1:, 2:3]
    p = scaler.inv_transform_vel(out[:, 1:, :])
    pb = jnp.stack([jnp.concatenate([jnp.cos(-ang), jnp.sin(-ang)], -1),
                    jnp.concatenate([jnp.cos(-ang + math.pi / 2),
                                     jnp.sin(-ang + math.pi / 2)], -1)], -2)
    vb = (pb @ p[:, :, :2][..., None])[..., 0]
    x_dot = jnp.concatenate([vb, p[:, :, 2:]], -1)
    idx3 = jnp.arange(3)
    pre = jnp.eye(6, dtype=jnp.float32).at[3:, 3:].set(0.0)
    post = (jnp.zeros((3, 6), jnp.float32).at[idx3, idx3].set(1.0)
            .at[idx3, 3 + idx3].set(1.0))
    return objects_state[:, 1:, :6] @ pre + x_dot @ post


# ----------------------------------------------------------------------------
if __name__ == "__main__":
    key = jax.random.PRNGKey(0)
    B, n_obj, state_dim, shape_dim, rel_info_dim = 2, 5, 8, 3, 1
    n_rel = n_obj * (n_obj - 1)

    ks = jax.random.split(key, 6)
    pos = jax.random.uniform(ks[0], (B, n_obj, 2), jnp.float32, 0.0, 0.6)
    rest = 0.3 * jax.random.normal(ks[1], (B, n_obj, state_dim - 2), jnp.float32)
    objects_state = jnp.concatenate([pos, rest], axis=-1)
    objects_shape = jax.random.uniform(ks[2], (B, n_obj, shape_dim), jnp.float32, 0.1, 1.0)
    relation_info = jax.random.normal(ks[3], (B, n_rel, rel_info_dim), jnp.float32)

    # deterministic Net parameters (relation MLP + object MLP)
    rel_in = rel_info_dim + 9 + 2 * shape_dim       # 16
    obj_in = 3 + shape_dim                          # 6
    H1, E, H2, OUT = 32, 16, 32, 3

    def dense(k, fi, fo):
        return jax.random.normal(k, (fi, fo), jnp.float32) / math.sqrt(fi)

    pk = jax.random.split(ks[4], 5)
    net_params = (
        dense(pk[0], rel_in, H1), jnp.zeros((1, H1), jnp.float32),
        dense(pk[1], H1, E),      jnp.zeros((1, E), jnp.float32),
        dense(pk[2], obj_in, H2), dense(pk[3], E, H2), jnp.zeros((1, H2), jnp.float32),
        dense(pk[4], H2, OUT),    jnp.zeros((1, OUT), jnp.float32),
    )

    scaler = Scaler(state_dim, shape_dim)
    model = GraphProcessorPhysicPredictor(scaler, net_params)
    x = {"objects_state": objects_state,
         "objects_shape": objects_shape,
         "relation_info": relation_info}

    y = model(x)
    y = jax.block_until_ready(y)
    assert y.shape == (B, n_obj - 1, 6), y.shape
    assert bool(jnp.all(jnp.isfinite(y)))

    # correctness check against the original matmul-based formulation
    y_ref = jax.block_until_ready(reference_forward(x, scaler, net_params))
    assert bool(jnp.allclose(y, y_ref, rtol=1e-4, atol=1e-4)), \
        float(jnp.max(jnp.abs(y - y_ref)))

    print("KERNEL_OK")
</pallas_src>

<mosaic_0001>
module attributes {stable_mosaic.version = 11 : i64} {
  func.func @_interaction_kernel(%arg0: memref<40x16xf32, #tpu.memory_space<vmem>>, %arg1: memref<10x6xf32, #tpu.memory_space<vmem>>, %arg2: memref<10x40xf32, #tpu.memory_space<vmem>>, %arg3: memref<16x32xf32, #tpu.memory_space<vmem>>, %arg4: memref<1x32xf32, #tpu.memory_space<vmem>>, %arg5: memref<32x16xf32, #tpu.memory_space<vmem>>, %arg6: memref<1x16xf32, #tpu.memory_space<vmem>>, %arg7: memref<6x32xf32, #tpu.memory_space<vmem>>, %arg8: memref<16x32xf32, #tpu.memory_space<vmem>>, %arg9: memref<1x32xf32, #tpu.memory_space<vmem>>, %arg10: memref<32x3xf32, #tpu.memory_space<vmem>>, %arg11: memref<1x3xf32, #tpu.memory_space<vmem>>, %arg12: memref<10x3xf32, #tpu.memory_space<vmem>>) attributes {dimension_semantics = [], scalar_prefetch = 0 : i64, scratch_operands = 0 : i64, tpu.core_type = #tpu.core_type<tc>} {
    %c0 = arith.constant 0 : index
    %c0_0 = arith.constant 0 : index
    %0 = vector.load %arg0[%c0, %c0_0] : memref<40x16xf32, #tpu.memory_space<vmem>>, vector<40x16xf32>
    %c0_1 = arith.constant 0 : index
    %c0_2 = arith.constant 0 : index
    %1 = vector.load %arg3[%c0_1, %c0_2] : memref<16x32xf32, #tpu.memory_space<vmem>>, vector<16x32xf32>
    %cst = arith.constant dense<0.000000e+00> : vector<40x32xf32>
    %2 = tpu.matmul %0, %1, %cst {dimension_numbers = #tpu.dot_dimension_numbers<[1], [0], [0], [1], [0, 0, 1, 1], [], []>} : vector<40x16xf32>, vector<16x32xf32>, vector<40x32xf32> -> vector<40x32xf32>
    %c0_3 = arith.constant 0 : index
    %c0_4 = arith.constant 0 : index
    %3 = vector.load %arg4[%c0_3, %c0_4] : memref<1x32xf32, #tpu.memory_space<vmem>>, vector<1x32xf32>
    %4 = vector.broadcast %3 : vector<1x32xf32> to vector<40x32xf32>
    %5 = arith.addf %2, %4 : vector<40x32xf32>
    %cst_5 = arith.constant 0.000000e+00 : f32
    %6 = vector.broadcast %cst_5 : f32 to vector<40x32xf32>
    %7 = arith.maximumf %5, %6 : vector<40x32xf32>
    %c0_6 = arith.constant 0 : index
    %c0_7 = arith.constant 0 : index
    %8 = vector.load %arg5[%c0_6, %c0_7] : memref<32x16xf32, #tpu.memory_space<vmem>>, vector<32x16xf32>
    %cst_8 = arith.constant dense<0.000000e+00> : vector<40x16xf32>
    %9 = tpu.matmul %7, %8, %cst_8 {dimension_numbers = #tpu.dot_dimension_numbers<[1], [0], [0], [1], [0, 0, 1, 1], [], []>} : vector<40x32xf32>, vector<32x16xf32>, vector<40x16xf32> -> vector<40x16xf32>
    %c0_9 = arith.constant 0 : index
    %c0_10 = arith.constant 0 : index
    %10 = vector.load %arg6[%c0_9, %c0_10] : memref<1x16xf32, #tpu.memory_space<vmem>>, vector<1x16xf32>
    %11 = vector.broadcast %10 : vector<1x16xf32> to vector<40x16xf32>
    %12 = arith.addf %9, %11 : vector<40x16xf32>
    %cst_11 = arith.constant 0.000000e+00 : f32
    %13 = vector.broadcast %cst_11 : f32 to vector<40x16xf32>
    %14 = arith.maximumf %12, %13 : vector<40x16xf32>
    %c0_12 = arith.constant 0 : index
    %c0_13 = arith.constant 0 : index
    %15 = vector.load %arg2[%c0_12, %c0_13] : memref<10x40xf32, #tpu.memory_space<vmem>>, vector<10x40xf32>
    %cst_14 = arith.constant dense<0.000000e+00> : vector<10x16xf32>
    %16 = tpu.matmul %15, %14, %cst_14 {dimension_numbers = #tpu.dot_dimension_numbers<[1], [0], [0], [1], [0, 0, 1, 1], [], []>} : vector<10x40xf32>, vector<40x16xf32>, vector<10x16xf32> -> vector<10x16xf32>
    %c0_15 = arith.constant 0 : index
    %c0_16 = arith.constant 0 : index
    %17 = vector.load %arg1[%c0_15, %c0_16] : memref<10x6xf32, #tpu.memory_space<vmem>>, vector<10x6xf32>
    %c0_17 = arith.constant 0 : index
    %c0_18 = arith.constant 0 : index
    %18 = vector.load %arg7[%c0_17, %c0_18] : memref<6x32xf32, #tpu.memory_space<vmem>>, vector<6x32xf32>
    %cst_19 = arith.constant dense<0.000000e+00> : vector<10x32xf32>
    %19 = tpu.matmul %17, %18, %cst_19 {dimension_numbers = #tpu.dot_dimension_numbers<[1], [0], [0], [1], [0, 0, 1, 1], [], []>} : vector<10x6xf32>, vector<6x32xf32>, vector<10x32xf32> -> vector<10x32xf32>
    %c0_20 = arith.constant 0 : index
    %c0_21 = arith.constant 0 : index
    %20 = vector.load %arg8[%c0_20, %c0_21] : memref<16x32xf32, #tpu.memory_space<vmem>>, vector<16x32xf32>
    %cst_22 = arith.constant dense<0.000000e+00> : vector<10x32xf32>
    %21 = tpu.matmul %16, %20, %cst_22 {dimension_numbers = #tpu.dot_dimension_numbers<[1], [0], [0], [1], [0, 0, 1, 1], [], []>} : vector<10x16xf32>, vector<16x32xf32>, vector<10x32xf32> -> vector<10x32xf32>
    %22 = arith.addf %19, %21 : vector<10x32xf32>
    %c0_23 = arith.constant 0 : index
    %c0_24 = arith.constant 0 : index
    %23 = vector.load %arg9[%c0_23, %c0_24] : memref<1x32xf32, #tpu.memory_space<vmem>>, vector<1x32xf32>
    %24 = vector.broadcast %23 : vector<1x32xf32> to vector<10x32xf32>
    %25 = arith.addf %22, %24 : vector<10x32xf32>
    %cst_25 = arith.constant 0.000000e+00 : f32
    %26 = vector.broadcast %cst_25 : f32 to vector<10x32xf32>
    %27 = arith.maximumf %25, %26 : vector<10x32xf32>
    %c0_26 = arith.constant 0 : index
    %c0_27 = arith.constant 0 : index
    %28 = vector.load %arg10[%c0_26, %c0_27] : memref<32x3xf32, #tpu.memory_space<vmem>>, vector<32x3xf32>
    %cst_28 = arith.constant dense<0.000000e+00> : vector<10x3xf32>
    %29 = tpu.matmul %27, %28, %cst_28 {dimension_numbers = #tpu.dot_dimension_numbers<[1], [0], [0], [1], [0, 0, 1, 1], [], []>} : vector<10x32xf32>, vector<32x3xf32>, vector<10x3xf32> -> vector<10x3xf32>
    %c0_29 = arith.constant 0 : index
    %c0_30 = arith.constant 0 : index
    %30 = vector.load %arg11[%c0_29, %c0_30] : memref<1x3xf32, #tpu.memory_space<vmem>>, vector<1x3xf32>
    %31 = vector.broadcast %30 : vector<1x3xf32> to vector<10x3xf32>
    %32 = arith.addf %29, %31 : vector<10x3xf32>
    %c0_31 = arith.constant 0 : index
    %c0_32 = arith.constant 0 : index
    %33 = vector.load %arg12[%c0_31, %c0_32] : memref<10x3xf32, #tpu.memory_space<vmem>>, vector<10x3xf32>
    tpu.vector_store %arg12[%c0_31, %c0_32], %32 {strides = array<i32>} : memref<10x3xf32, #tpu.memory_space<vmem>>, vector<10x3xf32>,
    return
  }
}

</mosaic_0001>

<llo_original>
// kernel: tpu_custom_call.1
$region0: #{tpu_custom_call.1}
  #allocation0 [shape = 'u32[]', space=smem, size = 0x4, offset = 0x4, fixed_abs, tag = 'smem constant byte address 0x4 - core index']
  #allocation1 [shape = 'u32[144,128]{1,0:T(1,128)}', space=vmem, size = 0x12000, scoped, tag = 'internal scratch']
  %s0 = inlined_call_operand.vmem [shape: f32[40,16], index: 0, kind: input, shape index: {}]
  %s1 = inlined_call_operand.vmem [shape: f32[10,6], index: 1, kind: input, shape index: {}]
  %s2 = inlined_call_operand.vmem [shape: f32[10,40], index: 2, kind: input, shape index: {}]
  %s3 = inlined_call_operand.vmem [shape: f32[16,32], index: 3, kind: input, shape index: {}]
  %s4 = inlined_call_operand.vmem [shape: f32[1,32], index: 4, kind: input, shape index: {}]
  %s5 = inlined_call_operand.vmem [shape: f32[32,16], index: 5, kind: input, shape index: {}]
  %s6 = inlined_call_operand.vmem [shape: f32[1,16], index: 6, kind: input, shape index: {}]
  %s7 = inlined_call_operand.vmem [shape: f32[6,32], index: 7, kind: input, shape index: {}]
  %s8 = inlined_call_operand.vmem [shape: f32[16,32], index: 8, kind: input, shape index: {}]
  %s9 = inlined_call_operand.vmem [shape: f32[1,32], index: 9, kind: input, shape index: {}]
  %s10 = inlined_call_operand.vmem [shape: f32[32,3], index: 10, kind: input, shape index: {}]
  %s11 = inlined_call_operand.vmem [shape: f32[1,3], index: 11, kind: input, shape index: {}]
  %s12 = inlined_call_operand.vmem [shape: f32[10,3], index: 12, kind: output, shape index: {}]
  %s13 = sld [smem:[#allocation0]]
  $region58: #{tpu_custom_call.1} parent=0
    _
  %s15 = ssub.s32 1, %s13
  %s16 = scalar_select 0, %s15, %s13
  // Predicated region
  $region2: #{tpu_custom_call.1} parent=0 // pred_check
    _
  $region3: #{tpu_custom_call.1} parent=0 // pred_check_branch
    %18 = sbr.rel (0) target = $region5
  $region4: #{tpu_custom_call.1} parent=0 // pred_region
    _
  $region5: #{tpu_custom_call.1} parent=0 // pred_fallthru
    _
  // Predicated region
  $region6: #{tpu_custom_call.1} parent=0 // pred_check
    _
  $region7: #{tpu_custom_call.1} parent=0 // pred_check_branch
    %20 = sbr.rel (0) target = $region9
  $region8: #{tpu_custom_call.1} parent=0 // pred_region
    _
  $region9: #{tpu_custom_call.1} parent=0 // pred_fallthru
    _
  // Predicated region
  $region10: #{tpu_custom_call.1} parent=0 // pred_check
    _
  $region11: #{tpu_custom_call.1} parent=0 // pred_check_branch
    %22 = sbr.rel (0) target = $region13
  $region12: #{tpu_custom_call.1} parent=0 // pred_region
    _
  $region13: #{tpu_custom_call.1} parent=0 // pred_fallthru
    _
  // Predicated region
  $region14: #{tpu_custom_call.1} parent=0 // pred_check
    _
  $region15: #{tpu_custom_call.1} parent=0 // pred_check_branch
    %24 = sbr.rel (0) target = $region17
  $region16: #{tpu_custom_call.1} parent=0 // pred_region
    _
  $region17: #{tpu_custom_call.1} parent=0 // pred_fallthru
    _
  // Predicated region
  $region18: #{tpu_custom_call.1} parent=0 // pred_check
    _
  $region19: #{tpu_custom_call.1} parent=0 // pred_check_branch
    %26 = sbr.rel (0) target = $region21
  $region20: #{tpu_custom_call.1} parent=0 // pred_region
    _
  $region21: #{tpu_custom_call.1} parent=0 // pred_fallthru
    _
  // Predicated region
  $region22: #{tpu_custom_call.1} parent=0 // pred_check
    _
  $region23: #{tpu_custom_call.1} parent=0 // pred_check_branch
    %28 = sbr.rel (0) target = $region25
  $region24: #{tpu_custom_call.1} parent=0 // pred_region
    _
  $region25: #{tpu_custom_call.1} parent=0 // pred_fallthru
    _
  // Predicated region
  $region26: #{tpu_custom_call.1} parent=0 // pred_check
    _
  $region27: #{tpu_custom_call.1} parent=0 // pred_check_branch
    %30 = sbr.rel (0) target = $region29
  $region28: #{tpu_custom_call.1} parent=0 // pred_region
    _
  $region29: #{tpu_custom_call.1} parent=0 // pred_fallthru
    _
  // Predicated region
  $region30: #{tpu_custom_call.1} parent=0 // pred_check
    _
  $region31: #{tpu_custom_call.1} parent=0 // pred_check_branch
    %32 = sbr.rel (0) target = $region33
  $region32: #{tpu_custom_call.1} parent=0 // pred_region
    _
  $region33: #{tpu_custom_call.1} parent=0 // pred_fallthru
    _
  // Predicated region
  $region34: #{tpu_custom_call.1} parent=0 // pred_check
    _
  $region35: #{tpu_custom_call.1} parent=0 // pred_check_branch
    %34 = sbr.rel (0) target = $region37
  $region36: #{tpu_custom_call.1} parent=0 // pred_region
    _
  $region37: #{tpu_custom_call.1} parent=0 // pred_fallthru
    _
  // Predicated region
  $region38: #{tpu_custom_call.1} parent=0 // pred_check
    _
  $region39: #{tpu_custom_call.1} parent=0 // pred_check_branch
    %36 = sbr.rel (0) target = $region41
  $region40: #{tpu_custom_call.1} parent=0 // pred_region
    _
  $region41: #{tpu_custom_call.1} parent=0 // pred_fallthru
    _
  // Predicated region
  $region42: #{tpu_custom_call.1} parent=0 // pred_check
    _
  $region43: #{tpu_custom_call.1} parent=0 // pred_check_branch
    %38 = sbr.rel (0) target = $region45
  $region44: #{tpu_custom_call.1} parent=0 // pred_region
    _
  $region45: #{tpu_custom_call.1} parent=0 // pred_fallthru
    _
  // Predicated region
  $region46: #{tpu_custom_call.1} parent=0 // pred_check
    _
  $region47: #{tpu_custom_call.1} parent=0 // pred_check_branch
    %40 = sbr.rel (0) target = $region49
  $region48: #{tpu_custom_call.1} parent=0 // pred_region
    _
  $region49: #{tpu_custom_call.1} parent=0 // pred_fallthru
    _
  %v41 = vld [vmem:[%s0] sm:$0xff]
  %v42 = vld [vmem:[%s0 + $0x8] sm:$0xff]
  %v43 = vld [vmem:[%s0 + $0x10] sm:$0xff]
  %v44 = vld [vmem:[%s0 + $0x18] sm:$0xff]
  %v45 = vld [vmem:[%s0 + $0x20] sm:$0xff]
  %v46 = vld [vmem:[%s3] sm:$0xff]
  %v47 = vld [vmem:[%s3 + $0x8] sm:$0xff]
  %v48 = vld [vmem:[%s4] sm:$0x1]
  %v50 = vlaneseq
  %v51 = vshrl.u32 %v50, 7
  %v52 = vsub.s32 0, %v51
  %v53 = vrot.slane %v48, %v52
  %vm55 = vcmask 130048
  %v57 = vsel %vm55, %v41, 0
  %v60 = vsel %vm55, %v42, 0
  %v63 = vsel %vm55, %v43, 0
  %v66 = vsel %vm55, %v44, 0
  %v69 = vsel %vm55, %v45, 0
  %71 = vmatprep.subr.mxu0 0.0
  %72 = vmatpush1.msra.mxu0 %v46
  %73 = vmatprep.subr.mxu0 0.0
  %74 = vmatpush1.msra.mxu0 %v47
  %75 = vmatprep.subr.mxu0 0.0
  %76 = vmatpush1.msra.mxu0 0.0
  %77 = vmatprep.subr.mxu0 0.0
  %78 = vmatpush1.msra.mxu0 0.0
  %79 = vmatprep.subr.mxu0 0.0
  %80 = vmatpush1.msra.mxu0 0.0
  %81 = vmatprep.subr.mxu0 0.0
  %82 = vmatpush1.msra.mxu0 0.0
  %83 = vmatprep.subr.mxu0 0.0
  %84 = vmatpush1.msra.mxu0 0.0
  %85 = vmatprep.subr.mxu0 0.0
  %86 = vmatpush1.msra.mxu0 0.0
  %87 = vmatprep.subr.mxu0 0.0
  %88 = vmatpush1.msra.mxu0 0.0
  %89 = vmatprep.subr.mxu0 0.0
  %90 = vmatpush1.msra.mxu0 0.0
  %91 = vmatprep.subr.mxu0 0.0
  %92 = vmatpush1.msra.mxu0 0.0
  %93 = vmatprep.subr.mxu0 0.0
  %94 = vmatpush1.msra.mxu0 0.0
  %95 = vmatprep.subr.mxu0 0.0
  %96 = vmatpush1.msra.mxu0 0.0
  %97 = vmatprep.subr.mxu0 0.0
  %98 = vmatpush1.msra.mxu0 0.0
  %99 = vmatprep.subr.mxu0 0.0
  %100 = vmatpush1.msra.mxu0 0.0
  %101 = vmatprep.subr.mxu0 0.0
  %102 = vmatpush1.msra.mxu0 0.0
  %103 = vmatprep.subr.mxu0 0.0
  %104 = vmatpush1.msra.mxu0 0.0
  %105 = vmatprep.subr.mxu0 0.0
  %106 = vmatpush1.msra.mxu0 0.0
  %107 = vmatprep.subr.mxu0 0.0
  %108 = vmatpush1.msra.mxu0 0.0
  %109 = vmatprep.subr.mxu0 0.0
  %110 = vmatpush1.msra.mxu0 0.0
  %111 = vmatprep.subr.mxu0 0.0
  %112 = vmatpush1.msra.mxu0 0.0
  %113 = vmatprep.subr.mxu0 0.0
  %114 = vmatpush1.msra.mxu0 0.0
  %115 = vmatprep.subr.mxu0 0.0
  %116 = vmatpush1.msra.mxu0 0.0
  %117 = vmatprep.subr.mxu0 0.0
  %118 = vmatpush1.msra.mxu0 0.0
  %119 = vmatprep.subr.mxu0 0.0
  %120 = vmatpush1.msra.mxu0 0.0
  %121 = vmatprep.subr.mxu0 0.0
  %122 = vmatpush1.msra.mxu0 0.0
  %123 = vmatprep.subr.mxu0 0.0
  %124 = vmatpush1.msra.mxu0 0.0
  %125 = vmatprep.subr.mxu0 0.0
  %126 = vmatpush1.msra.mxu0 0.0
  %127 = vmatprep.subr.mxu0 0.0
  %128 = vmatpush1.msra.mxu0 0.0
  %129 = vmatprep.subr.mxu0 0.0
  %130 = vmatpush1.msra.mxu0 0.0
  %131 = vmatprep.subr.mxu0 0.0
  %132 = vmatpush1.msra.mxu0 0.0
  %133 = vmatprep.subr.mxu0 0.0
  %134 = vmatpush1.msra.mxu0 0.0
  %135 = vmatprep.mubr.f32.mxu0 0.0
  %136 = vmatmul.mubr.f32.gmra.mrb[0].mxu0 %v57
  %v137 = vpop.f32.mrb[0].mxu0
  %v138 = vadd.f32 %v53, %v137
  %v139 = vpop.f32.mrb[0].mxu0
  %140 = vmatprep.mubr.f32.mxu0 0.0
  %141 = vmatmul.mubr.f32.gmra.mrb[0].mxu0 %v60
  %v142 = vpop.f32.mrb[0].mxu0
  %v143 = vadd.f32 %v53, %v142
  %v144 = vpop.f32.mrb[0].mxu0
  %145 = vmatprep.mubr.f32.mxu0 0.0
  %146 = vmatmul.mubr.f32.gmra.mrb[0].mxu0 %v63
  %v147 = vpop.f32.mrb[0].mxu0
  %v148 = vadd.f32 %v53, %v147
  %v149 = vpop.f32.mrb[0].mxu0
  %150 = vmatprep.mubr.f32.mxu0 0.0
  %151 = vmatmul.mubr.f32.gmra.mrb[0].mxu0 %v66
  %v152 = vpop.f32.mrb[0].mxu0
  %v153 = vadd.f32 %v53, %v152
  %v154 = vpop.f32.mrb[0].mxu0
  %155 = vmatprep.mubr.f32.mxu0 0.0
  %156 = vmatmul.mubr.f32.gmra.mrb[0].mxu0 %v69
  %v157 = vpop.f32.mrb[0].mxu0
  %v158 = vadd.f32 %v53, %v157
  %v159 = vpop.f32.mrb[0].mxu0
  %160 = vdwg.mxu0
  %v161 = vmax.f32 %v138, 0.0
  %v162 = vmax.f32 %v143, 0.0
  %v163 = vmax.f32 %v148, 0.0
  %v164 = vmax.f32 %v153, 0.0
  %v165 = vmax.f32 %v158, 0.0
  %v166 = vld [vmem:[%s5] sm:$0xff]
  %v167 = vld [vmem:[%s5 + $0x8] sm:$0xff]
  %v168 = vld [vmem:[%s5 + $0x10] sm:$0xff]
  %v169 = vld [vmem:[%s5 + $0x18] sm:$0xff]
  %v170 = vld [vmem:[%s6] sm:$0x1]
  %v172 = vlaneseq
  %v173 = vshrl.u32 %v172, 7
  %v174 = vsub.s32 0, %v173
  %v175 = vrot.slane %v170, %v174
  %vm177 = vcmask 261120
  %v179 = vsel %vm177, %v161, 0
  %v182 = vsel %vm177, %v162, 0
  %v185 = vsel %vm177, %v163, 0
  %v188 = vsel %vm177, %v164, 0
  %v191 = vsel %vm177, %v165, 0
  %193 = vmatprep.subr.mxu0 0.0
  %194 = vmatpush1.msra.mxu0 %v166
  %195 = vmatprep.subr.mxu0 0.0
  %196 = vmatpush1.msra.mxu0 %v167
  %197 = vmatprep.subr.mxu0 0.0
  %198 = vmatpush1.msra.mxu0 %v168
  %199 = vmatprep.subr.mxu0 0.0
  %200 = vmatpush1.msra.mxu0 %v169
  %201 = vmatprep.subr.mxu0 0.0
  %202 = vmatpush1.msra.mxu0 0.0
  %203 = vmatprep.subr.mxu0 0.0
  %204 = vmatpush1.msra.mxu0 0.0
  %205 = vmatprep.subr.mxu0 0.0
  %206 = vmatpush1.msra.mxu0 0.0
  %207 = vmatprep.subr.mxu0 0.0
  %208 = vmatpush1.msra.mxu0 0.0
  %209 = vmatprep.subr.mxu0 0.0
  %210 = vmatpush1.msra.mxu0 0.0
  %211 = vmatprep.subr.mxu0 0.0
  %212 = vmatpush1.msra.mxu0 0.0
  %213 = vmatprep.subr.mxu0 0.0
  %214 = vmatpush1.msra.mxu0 0.0
  %215 = vmatprep.subr.mxu0 0.0
  %216 = vmatpush1.msra.mxu0 0.0
  %217 = vmatprep.subr.mxu0 0.0
  %218 = vmatpush1.msra.mxu0 0.0
  %219 = vmatprep.subr.mxu0 0.0
  %220 = vmatpush1.msra.mxu0 0.0
  %221 = vmatprep.subr.mxu0 0.0
  %222 = vmatpush1.msra.mxu0 0.0
  %223 = vmatprep.subr.mxu0 0.0
  %224 = vmatpush1.msra.mxu0 0.0
  %225 = vmatprep.subr.mxu0 0.0
  %226 = vmatpush1.msra.mxu0 0.0
  %227 = vmatprep.subr.mxu0 0.0
  %228 = vmatpush1.msra.mxu0 0.0
  %229 = vmatprep.subr.mxu0 0.0
  %230 = vmatpush1.msra.mxu0 0.0
  %231 = vmatprep.subr.mxu0 0.0
  %232 = vmatpush1.msra.mxu0 0.0
  %233 = vmatprep.subr.mxu0 0.0
  %234 = vmatpush1.msra.mxu0 0.0
  %235 = vmatprep.subr.mxu0 0.0
  %236 = vmatpush1.msra.mxu0 0.0
  %237 = vmatprep.subr.mxu0 0.0
  %238 = vmatpush1.msra.mxu0 0.0
  %239 = vmatprep.subr.mxu0 0.0
  %240 = vmatpush1.msra.mxu0 0.0
  %241 = vmatprep.subr.mxu0 0.0
  %242 = vmatpush1.msra.mxu0 0.0
  %243 = vmatprep.subr.mxu0 0.0
  %244 = vmatpush1.msra.mxu0 0.0
  %245 = vmatprep.subr.mxu0 0.0
  %246 = vmatpush1.msra.mxu0 0.0
  %247 = vmatprep.subr.mxu0 0.0
  %248 = vmatpush1.msra.mxu0 0.0
  %249 = vmatprep.subr.mxu0 0.0
  %250 = vmatpush1.msra.mxu0 0.0
  %251 = vmatprep.subr.mxu0 0.0
  %252 = vmatpush1.msra.mxu0 0.0
  %253 = vmatprep.subr.mxu0 0.0
  %254 = vmatpush1.msra.mxu0 0.0
  %255 = vmatprep.subr.mxu0 0.0
  %256 = vmatpush1.msra.mxu0 0.0
  %257 = vmatprep.mubr.f32.mxu0 0.0
  %258 = vmatmul.mubr.f32.gmra.mrb[0].mxu0 %v179
  %v259 = vpop.f32.mrb[0].mxu0
  %v260 = vadd.f32 %v175, %v259
  %v261 = vpop.f32.mrb[0].mxu0
  %262 = vmatprep.mubr.f32.mxu0 0.0
  %263 = vmatmul.mubr.f32.gmra.mrb[0].mxu0 %v182
  %v264 = vpop.f32.mrb[0].mxu0
  %v265 = vadd.f32 %v175, %v264
  %v266 = vpop.f32.mrb[0].mxu0
  %267 = vmatprep.mubr.f32.mxu0 0.0
  %268 = vmatmul.mubr.f32.gmra.mrb[0].mxu0 %v185
  %v269 = vpop.f32.mrb[0].mxu0
  %v270 = vadd.f32 %v175, %v269
  %v271 = vpop.f32.mrb[0].mxu0
  %272 = vmatprep.mubr.f32.mxu0 0.0
  %273 = vmatmul.mubr.f32.gmra.mrb[0].mxu0 %v188
  %v274 = vpop.f32.mrb[0].mxu0
  %v275 = vadd.f32 %v175, %v274
  %v276 = vpop.f32.mrb[0].mxu0
  %277 = vmatprep.mubr.f32.mxu0 0.0
  %278 = vmatmul.mubr.f32.gmra.mrb[0].mxu0 %v191
  %v279 = vpop.f32.mrb[0].mxu0
  %v280 = vadd.f32 %v175, %v279
  %v281 = vpop.f32.mrb[0].mxu0
  %282 = vdwg.mxu0
  %v283 = vmax.f32 %v260, 0.0
  %v284 = vmax.f32 %v265, 0.0
  %v285 = vmax.f32 %v270, 0.0
  %v286 = vmax.f32 %v275, 0.0
  %v287 = vmax.f32 %v280, 0.0
  %v288 = vld [vmem:[%s2] sm:$0xff]
  %v289 = vld [vmem:[%s2 + $0x8] sm:$0x3]
  %vm290 = vcmask 326656
  %v292 = vsel %vm290, %v288, 0
  %v295 = vsel %vm290, %v289, 0
  %297 = vmatprep.subr.mxu0 0.0
  %298 = vmatpush1.msra.mxu0 %v283
  %299 = vmatprep.subr.mxu0 0.0
  %300 = vmatpush1.msra.mxu0 %v284
  %301 = vmatprep.subr.mxu0 0.0
  %302 = vmatpush1.msra.mxu0 %v285
  %303 = vmatprep.subr.mxu0 0.0
  %304 = vmatpush1.msra.mxu0 %v286
  %305 = vmatprep.subr.mxu0 0.0
  %306 = vmatpush1.msra.mxu0 %v287
  %307 = vmatprep.subr.mxu0 0.0
  %308 = vmatpush1.msra.mxu0 0.0
  %309 = vmatprep.subr.mxu0 0.0
  %310 = vmatpush1.msra.mxu0 0.0
  %311 = vmatprep.subr.mxu0 0.0
  %312 = vmatpush1.msra.mxu0 0.0
  %313 = vmatprep.subr.mxu0 0.0
  %314 = vmatpush1.msra.mxu0 0.0
  %315 = vmatprep.subr.mxu0 0.0
  %316 = vmatpush1.msra.mxu0 0.0
  %317 = vmatprep.subr.mxu0 0.0
  %318 = vmatpush1.msra.mxu0 0.0
  %319 = vmatprep.subr.mxu0 0.0
  %320 = vmatpush1.msra.mxu0 0.0
  %321 = vmatprep.subr.mxu0 0.0
  %322 = vmatpush1.msra.mxu0 0.0
  %323 = vmatprep.subr.mxu0 0.0
  %324 = vmatpush1.msra.mxu0 0.0
  %325 = vmatprep.subr.mxu0 0.0
  %326 = vmatpush1.msra.mxu0 0.0
  %327 = vmatprep.subr.mxu0 0.0
  %328 = vmatpush1.msra.mxu0 0.0
  %329 = vmatprep.subr.mxu0 0.0
  %330 = vmatpush1.msra.mxu0 0.0
  %331 = vmatprep.subr.mxu0 0.0
  %332 = vmatpush1.msra.mxu0 0.0
  %333 = vmatprep.subr.mxu0 0.0
  %334 = vmatpush1.msra.mxu0 0.0
  %335 = vmatprep.subr.mxu0 0.0
  %336 = vmatpush1.msra.mxu0 0.0
  %337 = vmatprep.subr.mxu0 0.0
  %338 = vmatpush1.msra.mxu0 0.0
  %339 = vmatprep.subr.mxu0 0.0
  %340 = vmatpush1.msra.mxu0 0.0
  %341 = vmatprep.subr.mxu0 0.0
  %342 = vmatpush1.msra.mxu0 0.0
  %343 = vmatprep.subr.mxu0 0.0
  %344 = vmatpush1.msra.mxu0 0.0
  %345 = vmatprep.subr.mxu0 0.0
  %346 = vmatpush1.msra.mxu0 0.0
  %347 = vmatprep.subr.mxu0 0.0
  %348 = vmatpush1.msra.mxu0 0.0
  %349 = vmatprep.subr.mxu0 0.0
  %350 = vmatpush1.msra.mxu0 0.0
  %351 = vmatprep.subr.mxu0 0.0
  %352 = vmatpush1.msra.mxu0 0.0
  %353 = vmatprep.subr.mxu0 0.0
  %354 = vmatpush1.msra.mxu0 0.0
  %355 = vmatprep.subr.mxu0 0.0
  %356 = vmatpush1.msra.mxu0 0.0
  %357 = vmatprep.subr.mxu0 0.0
  %358 = vmatpush1.msra.mxu0 0.0
  %359 = vmatprep.subr.mxu0 0.0
  %360 = vmatpush1.msra.mxu0 0.0
  %361 = vmatprep.mubr.f32.mxu0 0.0
  %362 = vmatmul.mubr.f32.gmra.mrb[0].mxu0 %v292
  %v363 = vpop.f32.mrb[0].mxu0
  %v364 = vadd.f32 0.0, %v363
  %v365 = vpop.f32.mrb[0].mxu0
  %366 = vmatprep.mubr.f32.mxu0 0.0
  %367 = vmatmul.mubr.f32.gmra.mrb[0].mxu0 %v295
  %v368 = vpop.f32.mrb[0].mxu0
  %v369 = vadd.f32 0.0, %v368
  %v370 = vpop.f32.mrb[0].mxu0
  %371 = vdwg.mxu0
  %v372 = vld [vmem:[%s1] sm:$0xff]
  %v373 = vld [vmem:[%s1 + $0x8] sm:$0x3]
  %v374 = vld [vmem:[%s7] sm:$0x3f]
  %v375 = vld [vmem:[%s8] sm:$0xff]
  %v376 = vld [vmem:[%s8 + $0x8] sm:$0xff]
  %v378 = vsel %vm55, %v364, 0
  %v381 = vsel %vm55, %v369, 0
  %383 = vmatprep.subr.mxu0 0.0
  %384 = vmatpush1.msra.mxu0 %v375
  %385 = vmatprep.subr.mxu0 0.0
  %386 = vmatpush1.msra.mxu0 %v376
  %387 = vmatprep.subr.mxu0 0.0
  %388 = vmatpush1.msra.mxu0 0.0
  %389 = vmatprep.subr.mxu0 0.0
  %390 = vmatpush1.msra.mxu0 0.0
  %391 = vmatprep.subr.mxu0 0.0
  %392 = vmatpush1.msra.mxu0 0.0
  %393 = vmatprep.subr.mxu0 0.0
  %394 = vmatpush1.msra.mxu0 0.0
  %395 = vmatprep.subr.mxu0 0.0
  %396 = vmatpush1.msra.mxu0 0.0
  %397 = vmatprep.subr.mxu0 0.0
  %398 = vmatpush1.msra.mxu0 0.0
  %399 = vmatprep.subr.mxu0 0.0
  %400 = vmatpush1.msra.mxu0 0.0
  %401 = vmatprep.subr.mxu0 0.0
  %402 = vmatpush1.msra.mxu0 0.0
  %403 = vmatprep.subr.mxu0 0.0
  %404 = vmatpush1.msra.mxu0 0.0
  %405 = vmatprep.subr.mxu0 0.0
  %406 = vmatpush1.msra.mxu0 0.0
  %407 = vmatprep.subr.mxu0 0.0
  %408 = vmatpush1.msra.mxu0 0.0
  %409 = vmatprep.subr.mxu0 0.0
  %410 = vmatpush1.msra.mxu0 0.0
  %411 = vmatprep.subr.mxu0 0.0
  %412 = vmatpush1.msra.mxu0 0.0
  %413 = vmatprep.subr.mxu0 0.0
  %414 = vmatpush1.msra.mxu0 0.0
  %415 = vmatprep.subr.mxu0 0.0
  %416 = vmatpush1.msra.mxu0 0.0
  %417 = vmatprep.subr.mxu0 0.0
  %418 = vmatpush1.msra.mxu0 0.0
  %419 = vmatprep.subr.mxu0 0.0
  %420 = vmatpush1.msra.mxu0 0.0
  %421 = vmatprep.subr.mxu0 0.0
  %422 = vmatpush1.msra.mxu0 0.0
  %423 = vmatprep.subr.mxu0 0.0
  %424 = vmatpush1.msra.mxu0 0.0
  %425 = vmatprep.subr.mxu0 0.0
  %426 = vmatpush1.msra.mxu0 0.0
  %427 = vmatprep.subr.mxu0 0.0
  %428 = vmatpush1.msra.mxu0 0.0
  %429 = vmatprep.subr.mxu0 0.0
  %430 = vmatpush1.msra.mxu0 0.0
  %431 = vmatprep.subr.mxu0 0.0
  %432 = vmatpush1.msra.mxu0 0.0
  %433 = vmatprep.subr.mxu0 0.0
  %434 = vmatpush1.msra.mxu0 0.0
  %435 = vmatprep.subr.mxu0 0.0
  %436 = vmatpush1.msra.mxu0 0.0
  %437 = vmatprep.subr.mxu0 0.0
  %438 = vmatpush1.msra.mxu0 0.0
  %439 = vmatprep.subr.mxu0 0.0
  %440 = vmatpush1.msra.mxu0 0.0
  %441 = vmatprep.subr.mxu0 0.0
  %442 = vmatpush1.msra.mxu0 0.0
  %443 = vmatprep.subr.mxu0 0.0
  %444 = vmatpush1.msra.mxu0 0.0
  %445 = vmatprep.subr.mxu0 0.0
  %446 = vmatpush1.msra.mxu0 0.0
  %447 = vmatprep.mubr.f32.mxu0 0.0
  %448 = vmatmul.mubr.f32.gmra.mrb[0].mxu0 %v378
  %v449 = vpop.f32.mrb[0].mxu0
  %v450 = vadd.f32 0.0, %v449
  %v451 = vpop.f32.mrb[0].mxu0
  %452 = vmatprep.mubr.f32.mxu0 0.0
  %453 = vmatmul.mubr.f32.gmra.mrb[0].mxu0 %v381
  %v454 = vpop.f32.mrb[0].mxu0
  %v455 = vadd.f32 0.0, %v454
  %v456 = vpop.f32.mrb[0].mxu0
  %457 = vdwg.mxu0
  %vm458 = vcmask 48128
  %v460 = vsel %vm458, %v372, 0
  %v463 = vsel %vm458, %v373, 0
  %vm465 = vcmask 1045504
  %v467 = vsel %vm465, %v374, 0
  %469 = vmatprep.subr.mxu0 0.0
  %470 = vmatpush1.msra.mxu0 %v467
  %471 = vmatprep.subr.mxu0 0.0
  %472 = vmatpush1.msra.mxu0 0.0
  %473 = vmatprep.subr.mxu0 0.0
  %474 = vmatpush1.msra.mxu0 0.0
  %475 = vmatprep.subr.mxu0 0.0
  %476 = vmatpush1.msra.mxu0 0.0
  %477 = vmatprep.subr.mxu0 0.0
  %478 = vmatpush1.msra.mxu0 0.0
  %479 = vmatprep.subr.mxu0 0.0
  %480 = vmatpush1.msra.mxu0 0.0
  %481 = vmatprep.subr.mxu0 0.0
  %482 = vmatpush1.msra.mxu0 0.0
  %483 = vmatprep.subr.mxu0 0.0
  %484 = vmatpush1.msra.mxu0 0.0
  %485 = vmatprep.subr.mxu0 0.0
  %486 = vmatpush1.msra.mxu0 0.0
  %487 = vmatprep.subr.mxu0 0.0
  %488 = vmatpush1.msra.mxu0 0.0
  %489 = vmatprep.subr.mxu0 0.0
  %490 = vmatpush1.msra.mxu0 0.0
  %491 = vmatprep.subr.mxu0 0.0
  %492 = vmatpush1.msra.mxu0 0.0
  %493 = vmatprep.subr.mxu0 0.0
  %494 = vmatpush1.msra.mxu0 0.0
  %495 = vmatprep.subr.mxu0 0.0
  %496 = vmatpush1.msra.mxu0 0.0
  %497 = vmatprep.subr.mxu0 0.0
  %498 = vmatpush1.msra.mxu0 0.0
  %499 = vmatprep.subr.mxu0 0.0
  %500 = vmatpush1.msra.mxu0 0.0
  %501 = vmatprep.subr.mxu0 0.0
  %502 = vmatpush1.msra.mxu0 0.0
  %503 = vmatprep.subr.mxu0 0.0
  %504 = vmatpush1.msra.mxu0 0.0
  %505 = vmatprep.subr.mxu0 0.0
  %506 = vmatpush1.msra.mxu0 0.0
  %507 = vmatprep.subr.mxu0 0.0
  %508 = vmatpush1.msra.mxu0 0.0
  %509 = vmatprep.subr.mxu0 0.0
  %510 = vmatpush1.msra.mxu0 0.0
  %511 = vmatprep.subr.mxu0 0.0
  %512 = vmatpush1.msra.mxu0 0.0
  %513 = vmatprep.subr.mxu0 0.0
  %514 = vmatpush1.msra.mxu0 0.0
  %515 = vmatprep.subr.mxu0 0.0
  %516 = vmatpush1.msra.mxu0 0.0
  %517 = vmatprep.subr.mxu0 0.0
  %518 = vmatpush1.msra.mxu0 0.0
  %519 = vmatprep.subr.mxu0 0.0
  %520 = vmatpush1.msra.mxu0 0.0
  %521 = vmatprep.subr.mxu0 0.0
  %522 = vmatpush1.msra.mxu0 0.0
  %523 = vmatprep.subr.mxu0 0.0
  %524 = vmatpush1.msra.mxu0 0.0
  %525 = vmatprep.subr.mxu0 0.0
  %526 = vmatpush1.msra.mxu0 0.0
  %527 = vmatprep.subr.mxu0 0.0
  %528 = vmatpush1.msra.mxu0 0.0
  %529 = vmatprep.subr.mxu0 0.0
  %530 = vmatpush1.msra.mxu0 0.0
  %531 = vmatprep.subr.mxu0 0.0
  %532 = vmatpush1.msra.mxu0 0.0
  %533 = vmatprep.mubr.f32.mxu0 0.0
  %534 = vmatmul.mubr.f32.gmra.mrb[0].mxu0 %v460
  %v535 = vpop.f32.mrb[0].mxu0
  %v536 = vadd.f32 %v450, %v535
  %v537 = vpop.f32.mrb[0].mxu0
  %538 = vmatprep.mubr.f32.mxu0 0.0
  %539 = vmatmul.mubr.f32.gmra.mrb[0].mxu0 %v463
  %v540 = vpop.f32.mrb[0].mxu0
  %v541 = vadd.f32 %v455, %v540
  %v542 = vpop.f32.mrb[0].mxu0
  %543 = vdwg.mxu0
  %v544 = vld [vmem:[%s9] sm:$0x1]
  %v546 = vlaneseq
  %v547 = vshrl.u32 %v546, 7
  %v548 = vsub.s32 0, %v547
  %v549 = vrot.slane %v544, %v548
  %v551 = vadd.f32 %v536, %v549
  %v552 = vadd.f32 %v541, %v549
  %v553 = vmax.f32 %v551, 0.0
  %v554 = vmax.f32 %v552, 0.0
  %v555 = vld [vmem:[%s10] sm:$0xff]
  %v556 = vld [vmem:[%s10 + $0x8] sm:$0xff]
  %v557 = vld [vmem:[%s10 + $0x10] sm:$0xff]
  %v558 = vld [vmem:[%s10 + $0x18] sm:$0xff]
  %v559 = vld [vmem:[%s11] sm:$0x1]
  %v561 = vlaneseq
  %v562 = vshrl.u32 %v561, 7
  %v563 = vsub.s32 0, %v562
  %v564 = vrot.slane %v559, %v563
  %v567 = vsel %vm177, %v553, 0
  %v570 = vsel %vm177, %v554, 0
  %572 = vmatprep.subr.mxu0 0.0
  %573 = vmatpush1.msra.mxu0 %v555
  %574 = vmatprep.subr.mxu0 0.0
  %575 = vmatpush1.msra.mxu0 %v556
  %576 = vmatprep.subr.mxu0 0.0
  %577 = vmatpush1.msra.mxu0 %v557
  %578 = vmatprep.subr.mxu0 0.0
  %579 = vmatpush1.msra.mxu0 %v558
  %580 = vmatprep.subr.mxu0 0.0
  %581 = vmatpush1.msra.mxu0 0.0
  %582 = vmatprep.subr.mxu0 0.0
  %583 = vmatpush1.msra.mxu0 0.0
  %584 = vmatprep.subr.mxu0 0.0
  %585 = vmatpush1.msra.mxu0 0.0
  %586 = vmatprep.subr.mxu0 0.0
  %587 = vmatpush1.msra.mxu0 0.0
  %588 = vmatprep.subr.mxu0 0.0
  %589 = vmatpush1.msra.mxu0 0.0
  %590 = vmatprep.subr.mxu0 0.0
  %591 = vmatpush1.msra.mxu0 0.0
  %592 = vmatprep.subr.mxu0 0.0
  %593 = vmatpush1.msra.mxu0 0.0
  %594 = vmatprep.subr.mxu0 0.0
  %595 = vmatpush1.msra.mxu0 0.0
  %596 = vmatprep.subr.mxu0 0.0
  %597 = vmatpush1.msra.mxu0 0.0
  %598 = vmatprep.subr.mxu0 0.0
  %599 = vmatpush1.msra.mxu0 0.0
  %600 = vmatprep.subr.mxu0 0.0
  %601 = vmatpush1.msra.mxu0 0.0
  %602 = vmatprep.subr.mxu0 0.0
  %603 = vmatpush1.msra.mxu0 0.0
  %604 = vmatprep.subr.mxu0 0.0
  %605 = vmatpush1.msra.mxu0 0.0
  %606 = vmatprep.subr.mxu0 0.0
  %607 = vmatpush1.msra.mxu0 0.0
  %608 = vmatprep.subr.mxu0 0.0
  %609 = vmatpush1.msra.mxu0 0.0
  %610 = vmatprep.subr.mxu0 0.0
  %611 = vmatpush1.msra.mxu0 0.0
  %612 = vmatprep.subr.mxu0 0.0
  %613 = vmatpush1.msra.mxu0 0.0
  %614 = vmatprep.subr.mxu0 0.0
  %615 = vmatpush1.msra.mxu0 0.0
  %616 = vmatprep.subr.mxu0 0.0
  %617 = vmatpush1.msra.mxu0 0.0
  %618 = vmatprep.subr.mxu0 0.0
  %619 = vmatpush1.msra.mxu0 0.0
  %620 = vmatprep.subr.mxu0 0.0
  %621 = vmatpush1.msra.mxu0 0.0
  %622 = vmatprep.subr.mxu0 0.0
  %623 = vmatpush1.msra.mxu0 0.0
  %624 = vmatprep.subr.mxu0 0.0
  %625 = vmatpush1.msra.mxu0 0.0
  %626 = vmatprep.subr.mxu0 0.0
  %627 = vmatpush1.msra.mxu0 0.0
  %628 = vmatprep.subr.mxu0 0.0
  %629 = vmatpush1.msra.mxu0 0.0
  %630 = vmatprep.subr.mxu0 0.0
  %631 = vmatpush1.msra.mxu0 0.0
  %632 = vmatprep.subr.mxu0 0.0
  %633 = vmatpush1.msra.mxu0 0.0
  %634 = vmatprep.subr.mxu0 0.0
  %635 = vmatpush1.msra.mxu0 0.0
  %636 = vmatprep.mubr.f32.mxu0 0.0
  %637 = vmatmul.mubr.f32.gmra.mrb[0].mxu0 %v567
  %v638 = vpop.f32.mrb[0].mxu0
  %v639 = vadd.f32 %v564, %v638
  %v640 = vpop.f32.mrb[0].mxu0
  %641 = vmatprep.mubr.f32.mxu0 0.0
  %642 = vmatmul.mubr.f32.gmra.mrb[0].mxu0 %v570
  %v643 = vpop.f32.mrb[0].mxu0
  %v644 = vadd.f32 %v564, %v643
  %v645 = vpop.f32.mrb[0].mxu0
  %646 = vdwg.mxu0
  %vm647 = vcmask 23552
  %648 = vst.msk [vmem:[%s12] sm:$0xff] %vm647, %v639
  %vm649 = vcmask 17408
  %650 = vst.msk [vmem:[%s12 + $0x8] sm:$0x3] %vm649, %v644
  // Predicated region
  $region50: #{tpu_custom_call.1} parent=0 // pred_check
    _
  $region51: #{tpu_custom_call.1} parent=0 // pred_check_branch
    %652 = sbr.rel (0) target = $region53
  $region52: #{tpu_custom_call.1} parent=0 // pred_region
    _
  $region53: #{tpu_custom_call.1} parent=0 // pred_fallthru
    _
  // Predicated region
  $region54: #{tpu_custom_call.1} parent=0 // pred_check
    _
  $region55: #{tpu_custom_call.1} parent=0 // pred_check_branch
    %654 = sbr.rel (0) target = $region57
  $region56: #{tpu_custom_call.1} parent=0 // pred_region
    _
  $region57: #{tpu_custom_call.1} parent=0 // pred_fallthru
    _

</llo_original>
